<compile_context>
chip_gen: v7x
topology: tpu7x:2x2x1
jax: 0.10.0
libtpu: 0.0.40
codegen_flags: <defaults>
</compile_context>

<pallas_src>
import functools

import jax
import jax.numpy as jnp
from jax.experimental import pallas as pl
from jax.experimental.pallas import tpu as pltpu


def _round_up(x: int, m: int) -> int:
    return ((x + m - 1) // m) * m


def _cdiv(a: int, b: int) -> int:
    return (a + b - 1) // b


# ----------------------------------------------------------------------------
# Kernel: whole MLP fused, activations never leave VMEM/vregs.
# ----------------------------------------------------------------------------
def _fused_mlp_kernel(x_ref, *refs, n_layers: int):
    """refs = (w1, b1, w2, b2, ..., wL, bL, o_ref).

    w_i: (K_i, N_pad_i) pre-transposed, bf16, zero-padded.
    b_i: (1, N_pad_i), f32, zero-padded.
    Computes h = relu(h @ w_i + b_i) for all but the last layer, plain
    h @ w_L + b_L for the last, entirely in-kernel.
    """
    o_ref = refs[-1]
    params = refs[:-1]
    h = x_ref[...].astype(jnp.float32)            # (tm, K0) f32
    for i in range(n_layers):
        w = params[2 * i][...]                    # (K_i, N_pad_i) bf16
        b = params[2 * i + 1][...]                # (1, N_pad_i)   f32
        # bf16 x bf16 -> f32 on the MXU; all elementwise work stays f32.
        h = jnp.dot(h.astype(jnp.bfloat16), w,
                    preferred_element_type=jnp.float32) + b
        if i < n_layers - 1:
            h = jnp.maximum(h, 0.0)
    o_ref[...] = h.astype(o_ref.dtype)


# ----------------------------------------------------------------------------
# Parameter prep (one-time, outside the kernel).
# ----------------------------------------------------------------------------
def init_mlp_params(key, input_dim, hidden_dim, output_dim):
    """PyTorch-layout params: W (out_features, in_features), b (out_features,).
    nn.Linear-style uniform init in [-1/sqrt(fan_in), 1/sqrt(fan_in)]."""
    dims = [input_dim] + list(hidden_dim) + [output_dim]
    params = []
    for i in range(len(dims) - 1):
        fan_in, fan_out = dims[i], dims[i + 1]
        key, kw, kb = jax.random.split(key, 3)
        bound = 1.0 / jnp.sqrt(float(fan_in))
        w = jax.random.uniform(kw, (fan_out, fan_in), jnp.float32,
                               minval=-bound, maxval=bound)
        b = jax.random.uniform(kb, (fan_out,), jnp.float32,
                               minval=-bound, maxval=bound)
        params.append((w, b))
    return params


def prepare_padded_params(params):
    """Transpose PyTorch (out,in) weights to (K, N); zero-pad N up to a
    multiple of 128 so every dot output / store is lane-dense.  For layer i>0,
    K equals the previous layer's padded N (extra rows zero) so the activation
    flows straight through; the FIRST layer keeps its true K so x needs no
    feature padding (no extra HBM pass over x).  Weights in bf16 (MXU
    operands), biases in f32.  Zero padding is exact: padded lanes are
    0 + 0 bias, ReLU(0)=0, and the next layer's padded K-rows are zero."""
    padded = []
    prev_n_pad = None
    for li, (w, b) in enumerate(params):
        n, k = w.shape
        k_pad = k if li == 0 else prev_n_pad
        n_pad = _round_up(n, 128)
        wt = jnp.zeros((k_pad, n_pad), jnp.float32).at[:k, :n].set(w.T)
        bp = jnp.zeros((1, n_pad), jnp.float32).at[0, :n].set(b)
        padded.append((wt.astype(jnp.bfloat16), bp))
        prev_n_pad = n_pad
    return padded


# ----------------------------------------------------------------------------
# Tile / VMEM budgeting.
# ----------------------------------------------------------------------------
def _vmem_capacity_bytes() -> int:
    try:
        return int(pltpu.get_tpu_info().vmem_capacity_bytes)
    except Exception:
        return 64 * 1024 * 1024   # conservative default: v7x per-TC VMEM


def _tile_vmem_need(tm, k_in, feat_pads, resident_bytes):
    n_out_pad = feat_pads[-1]
    max_feat = max(feat_pads)
    return (2 * tm * k_in * 4            # x tile, double-buffered, f32
            + 2 * tm * n_out_pad * 4     # out tile, double-buffered, f32
            + resident_bytes             # weights/biases, single-buffered
            + 2 * tm * max_feat * 6)     # intermediate h (f32 + bf16 copy), slack x2


def _pick_tm(m, k_in, feat_pads, resident_bytes, capacity):
    """Largest batch tile that fits a conservative VMEM budget."""
    budget = int(capacity * 0.6)         # headroom for Mosaic internal scratch
    tm = 8
    for cand in (512, 256, 128, 64, 32, 16, 8):
        if _tile_vmem_need(cand, k_in, feat_pads, resident_bytes) <= budget or cand == 8:
            tm = cand
            break
    tm = min(tm, _round_up(m, 8))
    # Megacore (v7x, 2 TCs): ensure >= 2 batch tiles when the batch allows it.
    if m >= 256 and _cdiv(m, tm) < 2:
        tm = _round_up(_cdiv(m, 2), 8)
    return tm


# ----------------------------------------------------------------------------
# Wrapper: single pallas_call, batch-tiled grid, resident weights.
# ----------------------------------------------------------------------------
def mlp_forward(x, padded_params, output_dim):
    m, k = x.shape
    n_layers = len(padded_params)
    n_out_pad = padded_params[-1][0].shape[1]
    feat_pads = [w.shape[1] for w, _ in padded_params]

    resident_bytes = sum(w.size * w.dtype.itemsize + b.size * b.dtype.itemsize
                         for w, b in padded_params)
    capacity = _vmem_capacity_bytes()
    tm = _pick_tm(m, k, feat_pads, resident_bytes, capacity)
    grid = (_cdiv(m, tm),)               # ragged last tile; no batch padding

    vmem_need = _tile_vmem_need(tm, k, feat_pads, resident_bytes)
    vmem_limit = min(max(vmem_need + (8 << 20), 16 << 20),
                     max(capacity - (8 << 20), 16 << 20))

    flat_params = []
    flops = 0
    bytes_accessed = x.size * 4 + m * n_out_pad * 4
    for w, b in padded_params:
        flat_params.extend([w, b])
        kp, np_ = w.shape
        flops += 2 * m * kp * np_
        bytes_accessed += w.size * 2 + b.size * 4

    kernel = functools.partial(_fused_mlp_kernel, n_layers=n_layers)
    out_shape = jax.ShapeDtypeStruct((m, n_out_pad), jnp.float32)
    x_spec = pl.BlockSpec((tm, k), lambda i: (i, 0))
    out_spec = pl.BlockSpec((tm, n_out_pad), lambda i: (i, 0))

    def run(single_buffer_weights: bool):
        in_specs = [x_spec]
        for w, b in padded_params:
            if single_buffer_weights:
                # Constant index_map -> grid-invariant; single buffer halves
                # the resident-weight VMEM footprint (matters on v7x 64 MiB).
                in_specs.append(pl.BlockSpec(w.shape, lambda i: (0, 0),
                                             pipeline_mode=pl.Buffered(1)))
                in_specs.append(pl.BlockSpec(b.shape, lambda i: (0, 0),
                                             pipeline_mode=pl.Buffered(1)))
            else:
                in_specs.append(pl.BlockSpec(w.shape, lambda i: (0, 0)))
                in_specs.append(pl.BlockSpec(b.shape, lambda i: (0, 0)))
        return pl.pallas_call(
            kernel,
            out_shape=out_shape,
            grid=grid,
            in_specs=in_specs,
            out_specs=out_spec,
            compiler_params=pltpu.CompilerParams(
                dimension_semantics=("parallel",),   # shard batch tiles across TCs
                vmem_limit_bytes=int(vmem_limit)),
            cost_estimate=pl.CostEstimate(
                flops=int(flops), transcendentals=0,
                bytes_accessed=int(bytes_accessed)),
        )(x, *flat_params)

    # TODO(synk): if hidden dims ever grow so large that resident weights no
    # longer fit the VMEM budget, add a trailing "arbitrary" K-reduction grid
    # axis with a pl.when-initialized f32 accumulator instead of shrinking tm.
    try:
        out = run(single_buffer_weights=hasattr(pl, "Buffered"))
    except Exception:
        out = run(single_buffer_weights=False)

    # Strip the lane padding: true output_dim columns (batch was never padded).
    return out[:, :output_dim]


# ----------------------------------------------------------------------------
if __name__ == "__main__":
    # Small shapes consistent with the module's forward: x is (batch, input_dim)
    batch = 8
    input_dim = 16
    hidden_dim = [32, 32]
    output_dim = 8

    key = jax.random.PRNGKey(0)
    key, kx = jax.random.split(key)
    x = jax.random.normal(kx, (batch, input_dim), dtype=jnp.float32)

    params = init_mlp_params(key, input_dim, hidden_dim, output_dim)
    padded_params = prepare_padded_params(params)

    y = mlp_forward(x, padded_params, output_dim)
    y = jax.block_until_ready(y)

    # Reference check in plain JAX against the original (exact f32) params.
    h_ref = x
    for i, (w, b) in enumerate(params):
        h_ref = h_ref @ w.T + b
        if i != len(params) - 1:
            h_ref = jnp.maximum(h_ref, 0.0)
    assert y.shape == (batch, output_dim)
    # Tolerance loosened vs the f32 reference because the kernel feeds the MXU
    # bf16 operands (weights + dot inputs); accumulation stays f32.
    assert jnp.allclose(y, h_ref, atol=2e-2, rtol=2e-2), (
        f"max abs err {float(jnp.max(jnp.abs(y - h_ref)))}")

    # TODO(synk): predict/predict_proba (argmax / softmax on host, DataFrame
    # glue) are inference-time utilities outside the nn.Module forward and are
    # not kernelized.
    print("KERNEL_OK")
</pallas_src>

<mosaic_0001>
module attributes {stable_mosaic.version = 11 : i64} {
  func.func @_fused_mlp_kernel(%arg0: i32, %arg1: memref<8x16xf32, #tpu.memory_space<vmem>>, %arg2: memref<16x128xbf16, #tpu.memory_space<vmem>>, %arg3: memref<1x128xf32, #tpu.memory_space<vmem>>, %arg4: memref<128x128xbf16, #tpu.memory_space<vmem>>, %arg5: memref<1x128xf32, #tpu.memory_space<vmem>>, %arg6: memref<128x128xbf16, #tpu.memory_space<vmem>>, %arg7: memref<1x128xf32, #tpu.memory_space<vmem>>, %arg8: memref<8x128xf32, #tpu.memory_space<vmem>>) attributes {dimension_semantics = [#tpu.dimension_semantics<parallel>], iteration_bounds = array<i64: 1>, scalar_prefetch = 0 : i64, scratch_operands = 0 : i64, tpu.core_type = #tpu.core_type<tc>, window_params = [{transform_indices = @transform_0, window_bounds = array<i64: 8, 16>}, {pipeline_mode = #tpu.pipeline_mode<synchronous>, transform_indices = @transform_1, window_bounds = array<i64: 16, 128>}, {pipeline_mode = #tpu.pipeline_mode<synchronous>, transform_indices = @transform_2, window_bounds = array<i64: 1, 128>}, {pipeline_mode = #tpu.pipeline_mode<synchronous>, transform_indices = @transform_3, window_bounds = array<i64: 128, 128>}, {pipeline_mode = #tpu.pipeline_mode<synchronous>, transform_indices = @transform_4, window_bounds = array<i64: 1, 128>}, {pipeline_mode = #tpu.pipeline_mode<synchronous>, transform_indices = @transform_5, window_bounds = array<i64: 128, 128>}, {pipeline_mode = #tpu.pipeline_mode<synchronous>, transform_indices = @transform_6, window_bounds = array<i64: 1, 128>}, {transform_indices = @transform_7, window_bounds = array<i64: 8, 128>}]} {
    %c0 = arith.constant 0 : index
    %c0_0 = arith.constant 0 : index
    %0 = vector.load %arg1[%c0, %c0_0] : memref<8x16xf32, #tpu.memory_space<vmem>>, vector<8x16xf32>
    %c0_1 = arith.constant 0 : index
    %c0_2 = arith.constant 0 : index
    %1 = vector.load %arg2[%c0_1, %c0_2] : memref<16x128xbf16, #tpu.memory_space<vmem>>, vector<16x128xbf16>
    %c0_3 = arith.constant 0 : index
    %c0_4 = arith.constant 0 : index
    %2 = vector.load %arg3[%c0_3, %c0_4] : memref<1x128xf32, #tpu.memory_space<vmem>>, vector<1x128xf32>
    %3 = arith.truncf %0 : vector<8x16xf32> to vector<8x16xbf16>
    %cst = arith.constant dense<0.000000e+00> : vector<8x128xf32>
    %4 = tpu.matmul %3, %1, %cst {dimension_numbers = #tpu.dot_dimension_numbers<[1], [0], [0], [1], [0, 0, 1, 1], [], []>} : vector<8x16xbf16>, vector<16x128xbf16>, vector<8x128xf32> -> vector<8x128xf32>
    %5 = vector.broadcast %2 : vector<1x128xf32> to vector<8x128xf32>
    %6 = arith.addf %4, %5 : vector<8x128xf32>
    %cst_5 = arith.constant 0.000000e+00 : f32
    %7 = vector.broadcast %cst_5 : f32 to vector<8x128xf32>
    %8 = arith.maximumf %6, %7 : vector<8x128xf32>
    %c0_6 = arith.constant 0 : index
    %c0_7 = arith.constant 0 : index
    %9 = vector.load %arg4[%c0_6, %c0_7] : memref<128x128xbf16, #tpu.memory_space<vmem>>, vector<128x128xbf16>
    %c0_8 = arith.constant 0 : index
    %c0_9 = arith.constant 0 : index
    %10 = vector.load %arg5[%c0_8, %c0_9] : memref<1x128xf32, #tpu.memory_space<vmem>>, vector<1x128xf32>
    %11 = arith.truncf %8 : vector<8x128xf32> to vector<8x128xbf16>
    %cst_10 = arith.constant dense<0.000000e+00> : vector<8x128xf32>
    %12 = tpu.matmul %11, %9, %cst_10 {dimension_numbers = #tpu.dot_dimension_numbers<[1], [0], [0], [1], [0, 0, 1, 1], [], []>} : vector<8x128xbf16>, vector<128x128xbf16>, vector<8x128xf32> -> vector<8x128xf32>
    %13 = vector.broadcast %10 : vector<1x128xf32> to vector<8x128xf32>
    %14 = arith.addf %12, %13 : vector<8x128xf32>
    %cst_11 = arith.constant 0.000000e+00 : f32
    %15 = vector.broadcast %cst_11 : f32 to vector<8x128xf32>
    %16 = arith.maximumf %14, %15 : vector<8x128xf32>
    %c0_12 = arith.constant 0 : index
    %c0_13 = arith.constant 0 : index
    %17 = vector.load %arg6[%c0_12, %c0_13] : memref<128x128xbf16, #tpu.memory_space<vmem>>, vector<128x128xbf16>
    %c0_14 = arith.constant 0 : index
    %c0_15 = arith.constant 0 : index
    %18 = vector.load %arg7[%c0_14, %c0_15] : memref<1x128xf32, #tpu.memory_space<vmem>>, vector<1x128xf32>
    %19 = arith.truncf %16 : vector<8x128xf32> to vector<8x128xbf16>
    %cst_16 = arith.constant dense<0.000000e+00> : vector<8x128xf32>
    %20 = tpu.matmul %19, %17, %cst_16 {dimension_numbers = #tpu.dot_dimension_numbers<[1], [0], [0], [1], [0, 0, 1, 1], [], []>} : vector<8x128xbf16>, vector<128x128xbf16>, vector<8x128xf32> -> vector<8x128xf32>
    %21 = vector.broadcast %18 : vector<1x128xf32> to vector<8x128xf32>
    %22 = arith.addf %20, %21 : vector<8x128xf32>
    %c0_17 = arith.constant 0 : index
    %c0_18 = arith.constant 0 : index
    %23 = vector.load %arg8[%c0_17, %c0_18] : memref<8x128xf32, #tpu.memory_space<vmem>>, vector<8x128xf32>
    tpu.vector_store %arg8[%c0_17, %c0_18], %22 {strides = array<i32>} : memref<8x128xf32, #tpu.memory_space<vmem>>, vector<8x128xf32>,
    return
  }
  func.func @transform_0(%arg0: i32) -> (i32, i32) {
    %c0_i32 = arith.constant 0 : i32
    %c0_i32_0 = arith.constant 0 : i32
    return %arg0, %c0_i32 : i32, i32
  }
  func.func @transform_1(%arg0: i32) -> (i32, i32) {
    %c0_i32 = arith.constant 0 : i32
    %c0_i32_0 = arith.constant 0 : i32
    %c0_i32_1 = arith.constant 0 : i32
    return %c0_i32, %c0_i32_0 : i32, i32
  }
  func.func @transform_2(%arg0: i32) -> (i32, i32) {
    %c0_i32 = arith.constant 0 : i32
    %c0_i32_0 = arith.constant 0 : i32
    %c0_i32_1 = arith.constant 0 : i32
    return %c0_i32, %c0_i32_0 : i32, i32
  }
  func.func @transform_3(%arg0: i32) -> (i32, i32) {
    %c0_i32 = arith.constant 0 : i32
    %c0_i32_0 = arith.constant 0 : i32
    %c0_i32_1 = arith.constant 0 : i32
    return %c0_i32, %c0_i32_0 : i32, i32
  }
  func.func @transform_4(%arg0: i32) -> (i32, i32) {
    %c0_i32 = arith.constant 0 : i32
    %c0_i32_0 = arith.constant 0 : i32
    %c0_i32_1 = arith.constant 0 : i32
    return %c0_i32, %c0_i32_0 : i32, i32
  }
  func.func @transform_5(%arg0: i32) -> (i32, i32) {
    %c0_i32 = arith.constant 0 : i32
    %c0_i32_0 = arith.constant 0 : i32
    %c0_i32_1 = arith.constant 0 : i32
    return %c0_i32, %c0_i32_0 : i32, i32
  }
  func.func @transform_6(%arg0: i32) -> (i32, i32) {
    %c0_i32 = arith.constant 0 : i32
    %c0_i32_0 = arith.constant 0 : i32
    %c0_i32_1 = arith.constant 0 : i32
    return %c0_i32, %c0_i32_0 : i32, i32
  }
  func.func @transform_7(%arg0: i32) -> (i32, i32) {
    %c0_i32 = arith.constant 0 : i32
    %c0_i32_0 = arith.constant 0 : i32
    return %arg0, %c0_i32 : i32, i32
  }
}

module attributes {stable_mosaic.version = 11 : i64} {
  func.func @_fused_mlp_kernel(%arg0: i32, %arg1: memref<8x16xf32, #tpu.memory_space<vmem>>, %arg2: memref<16x128xbf16, #tpu.memory_space<vmem>>, %arg3: memref<1x128xf32, #tpu.memory_space<vmem>>, %arg4: memref<128x128xbf16, #tpu.memory_space<vmem>>, %arg5: memref<1x128xf32, #tpu.memory_space<vmem>>, %arg6: memref<128x128xbf16, #tpu.memory_space<vmem>>, %arg7: memref<1x128xf32, #tpu.memory_space<vmem>>, %arg8: memref<8x128xf32, #tpu.memory_space<vmem>>) attributes {dimension_semantics = [#tpu.dimension_semantics<parallel>], iteration_bounds = array<i64: 1>, scalar_prefetch = 0 : i64, scratch_operands = 0 : i64, tpu.core_type = #tpu.core_type<tc>, window_params = [{transform_indices = @transform_0, window_bounds = array<i64: 8, 16>}, {pipeline_mode = #tpu.pipeline_mode<synchronous>, transform_indices = @transform_1, window_bounds = array<i64: 16, 128>}, {pipeline_mode = #tpu.pipeline_mode<synchronous>, transform_indices = @transform_2, window_bounds = array<i64: 1, 128>}, {pipeline_mode = #tpu.pipeline_mode<synchronous>, transform_indices = @transform_3, window_bounds = array<i64: 128, 128>}, {pipeline_mode = #tpu.pipeline_mode<synchronous>, transform_indices = @transform_4, window_bounds = array<i64: 1, 128>}, {pipeline_mode = #tpu.pipeline_mode<synchronous>, transform_indices = @transform_5, window_bounds = array<i64: 128, 128>}, {pipeline_mode = #tpu.pipeline_mode<synchronous>, transform_indices = @transform_6, window_bounds = array<i64: 1, 128>}, {transform_indices = @transform_7, window_bounds = array<i64: 8, 128>}]} {
    %c0 = arith.constant 0 : index
    %c0_0 = arith.constant 0 : index
    %0 = vector.load %arg1[%c0, %c0_0] : memref<8x16xf32, #tpu.memory_space<vmem>>, vector<8x16xf32>
    %c0_1 = arith.constant 0 : index
    %c0_2 = arith.constant 0 : index
    %1 = vector.load %arg2[%c0_1, %c0_2] : memref<16x128xbf16, #tpu.memory_space<vmem>>, vector<16x128xbf16>
    %c0_3 = arith.constant 0 : index
    %c0_4 = arith.constant 0 : index
    %2 = vector.load %arg3[%c0_3, %c0_4] : memref<1x128xf32, #tpu.memory_space<vmem>>, vector<1x128xf32>
    %3 = arith.truncf %0 : vector<8x16xf32> to vector<8x16xbf16>
    %cst = arith.constant dense<0.000000e+00> : vector<8x128xf32>
    %4 = tpu.matmul %3, %1, %cst {dimension_numbers = #tpu.dot_dimension_numbers<[1], [0], [0], [1], [0, 0, 1, 1], [], []>} : vector<8x16xbf16>, vector<16x128xbf16>, vector<8x128xf32> -> vector<8x128xf32>
    %5 = vector.broadcast %2 : vector<1x128xf32> to vector<8x128xf32>
    %6 = arith.addf %4, %5 : vector<8x128xf32>
    %cst_5 = arith.constant 0.000000e+00 : f32
    %7 = vector.broadcast %cst_5 : f32 to vector<8x128xf32>
    %8 = arith.maximumf %6, %7 : vector<8x128xf32>
    %c0_6 = arith.constant 0 : index
    %c0_7 = arith.constant 0 : index
    %9 = vector.load %arg4[%c0_6, %c0_7] : memref<128x128xbf16, #tpu.memory_space<vmem>>, vector<128x128xbf16>
    %c0_8 = arith.constant 0 : index
    %c0_9 = arith.constant 0 : index
    %10 = vector.load %arg5[%c0_8, %c0_9] : memref<1x128xf32, #tpu.memory_space<vmem>>, vector<1x128xf32>
    %11 = arith.truncf %8 : vector<8x128xf32> to vector<8x128xbf16>
    %cst_10 = arith.constant dense<0.000000e+00> : vector<8x128xf32>
    %12 = tpu.matmul %11, %9, %cst_10 {dimension_numbers = #tpu.dot_dimension_numbers<[1], [0], [0], [1], [0, 0, 1, 1], [], []>} : vector<8x128xbf16>, vector<128x128xbf16>, vector<8x128xf32> -> vector<8x128xf32>
    %13 = vector.broadcast %10 : vector<1x128xf32> to vector<8x128xf32>
    %14 = arith.addf %12, %13 : vector<8x128xf32>
    %cst_11 = arith.constant 0.000000e+00 : f32
    %15 = vector.broadcast %cst_11 : f32 to vector<8x128xf32>
    %16 = arith.maximumf %14, %15 : vector<8x128xf32>
    %c0_12 = arith.constant 0 : index
    %c0_13 = arith.constant 0 : index
    %17 = vector.load %arg6[%c0_12, %c0_13] : memref<128x128xbf16, #tpu.memory_space<vmem>>, vector<128x128xbf16>
    %c0_14 = arith.constant 0 : index
    %c0_15 = arith.constant 0 : index
    %18 = vector.load %arg7[%c0_14, %c0_15] : memref<1x128xf32, #tpu.memory_space<vmem>>, vector<1x128xf32>
    %19 = arith.truncf %16 : vector<8x128xf32> to vector<8x128xbf16>
    %cst_16 = arith.constant dense<0.000000e+00> : vector<8x128xf32>
    %20 = tpu.matmul %19, %17, %cst_16 {dimension_numbers = #tpu.dot_dimension_numbers<[1], [0], [0], [1], [0, 0, 1, 1], [], []>} : vector<8x128xbf16>, vector<128x128xbf16>, vector<8x128xf32> -> vector<8x128xf32>
    %21 = vector.broadcast %18 : vector<1x128xf32> to vector<8x128xf32>
    %22 = arith.addf %20, %21 : vector<8x128xf32>
    %c0_17 = arith.constant 0 : index
    %c0_18 = arith.constant 0 : index
    %23 = vector.load %arg8[%c0_17, %c0_18] : memref<8x128xf32, #tpu.memory_space<vmem>>, vector<8x128xf32>
    tpu.vector_store %arg8[%c0_17, %c0_18], %22 {strides = array<i32>} : memref<8x128xf32, #tpu.memory_space<vmem>>, vector<8x128xf32>,
    return
  }
  func.func @transform_0(%arg0: i32) -> (i32, i32) {
    %c0_i32 = arith.constant 0 : i32
    %c0_i32_0 = arith.constant 0 : i32
    return %arg0, %c0_i32 : i32, i32
  }
  func.func @transform_1(%arg0: i32) -> (i32, i32) {
    %c0_i32 = arith.constant 0 : i32
    %c0_i32_0 = arith.constant 0 : i32
    %c0_i32_1 = arith.constant 0 : i32
    return %c0_i32, %c0_i32_0 : i32, i32
  }
  func.func @transform_2(%arg0: i32) -> (i32, i32) {
    %c0_i32 = arith.constant 0 : i32
    %c0_i32_0 = arith.constant 0 : i32
    %c0_i32_1 = arith.constant 0 : i32
    return %c0_i32, %c0_i32_0 : i32, i32
  }
  func.func @transform_3(%arg0: i32) -> (i32, i32) {
    %c0_i32 = arith.constant 0 : i32
    %c0_i32_0 = arith.constant 0 : i32
    %c0_i32_1 = arith.constant 0 : i32
    return %c0_i32, %c0_i32_0 : i32, i32
  }
  func.func @transform_4(%arg0: i32) -> (i32, i32) {
    %c0_i32 = arith.constant 0 : i32
    %c0_i32_0 = arith.constant 0 : i32
    %c0_i32_1 = arith.constant 0 : i32
    return %c0_i32, %c0_i32_0 : i32, i32
  }
  func.func @transform_5(%arg0: i32) -> (i32, i32) {
    %c0_i32 = arith.constant 0 : i32
    %c0_i32_0 = arith.constant 0 : i32
    %c0_i32_1 = arith.constant 0 : i32
    return %c0_i32, %c0_i32_0 : i32, i32
  }
  func.func @transform_6(%arg0: i32) -> (i32, i32) {
    %c0_i32 = arith.constant 0 : i32
    %c0_i32_0 = arith.constant 0 : i32
    %c0_i32_1 = arith.constant 0 : i32
    return %c0_i32, %c0_i32_0 : i32, i32
  }
  func.func @transform_7(%arg0: i32) -> (i32, i32) {
    %c0_i32 = arith.constant 0 : i32
    %c0_i32_0 = arith.constant 0 : i32
    return %arg0, %c0_i32 : i32, i32
  }
}

</mosaic_0001>

<llo_original>
// kernel: tpu_custom_call.1
$region0: #{tpu_custom_call.1}
  #allocation0 [shape = 'u32[]', space=smem, size = 0x4, offset = 0x4, fixed_abs, tag = 'smem constant byte address 0x4 - core index']
  #allocation1 [shape = 'u32[144,128]{1,0:T(1,128)}', space=vmem, size = 0x12000, scoped, tag = 'internal scratch']
  %s0 = inlined_call_operand.hbm [shape: f32[8,16], index: 0, kind: input, shape index: {}]
  %s1 = inlined_call_operand.hbm [shape: bf16[16,128], index: 1, kind: input, shape index: {}]
  %s2 = inlined_call_operand.vmem [shape: f32[1,128], index: 2, kind: input, shape index: {}]
  %s3 = inlined_call_operand.hbm [shape: bf16[128,128], index: 3, kind: input, shape index: {}]
  %s4 = inlined_call_operand.vmem [shape: f32[1,128], index: 4, kind: input, shape index: {}]
  %s5 = inlined_call_operand.hbm [shape: bf16[128,128], index: 5, kind: input, shape index: {}]
  %s6 = inlined_call_operand.vmem [shape: f32[1,128], index: 6, kind: input, shape index: {}]
  %s7 = inlined_call_operand.hbm [shape: f32[8,128], index: 7, kind: output, shape index: {}]
  %s8 = sld [smem:[#allocation0]]
  $region54: #{tpu_custom_call.1} parent=0
    _
  %s10 = ssub.s32 1, %s8
  %s11 = scalar_select 0, %s10, %s8
  $region1: #{tpu_custom_call.1} parent=0
    #allocation2 [shape = 'u8[4096]{0}', space=vmem, size = 0x1000, scoped, tag = 'input window, operand 0, single buffered']
    #allocation3 [shape = 's32[1]{0}', space=sflag, size = 0x4, scoped, tag = 'scoped memory for tpu_custom_call.1']
    #allocation4 [shape = 's32[1]{0}', space=sflag, size = 0x4, scoped, tag = 'scoped memory for tpu_custom_call.1']
    #allocation5 [shape = 'u8[4096]{0}', space=vmem, size = 0x1000, scoped, tag = 'input window, operand 1, single buffered']
    #allocation6 [shape = 's32[1]{0}', space=sflag, size = 0x4, scoped, tag = 'scoped memory for tpu_custom_call.1']
    #allocation7 [shape = 'u8[32768]{0}', space=vmem, size = 0x8000, scoped, tag = 'input window, operand 3, single buffered']
    #allocation8 [shape = 'u8[32768]{0}', space=vmem, size = 0x8000, scoped, tag = 'input window, operand 5, single buffered']
    #allocation9 [shape = 's32[1]{0}', space=sflag, size = 0x4, scoped, tag = 'scoped memory for tpu_custom_call.1']
    #allocation10 [shape = 'u8[4096]{0}', space=vmem, size = 0x1000, scoped, tag = 'output window, operand 0, single buffered']
    %12 = vsyncpa [#allocation3], 0
    %13 = vsyncpa [#allocation6], 0
    %14 = vsyncpa [#allocation9], 0
    %15 = vsyncpa [#allocation4], 0
    // Predicated region
    $region2: #{tpu_custom_call.1} parent=1 // pred_check
      _
    $region3: #{tpu_custom_call.1} parent=1 // pred_check_branch
      %17 = sbr.rel (0) target = $region5
    $region4: #{tpu_custom_call.1} parent=1 // pred_region
      %s19 = ssub.s32 128, 128
      %20 = vsyncadd [#allocation3], %s19
      %s22 = sshll.u32 [#allocation2], 4
      %s23 = int_to_ptr.vmem [resolvable:$true] %s22
      %25 = dma.hbm_to_vmem [thread:$0]  %s0, 128, %s23, [#allocation3]
    $region5: #{tpu_custom_call.1} parent=1 // pred_fallthru
      _
    // Predicated region
    $region6: #{tpu_custom_call.1} parent=1 // pred_check
      _
    $region7: #{tpu_custom_call.1} parent=1 // pred_check_branch
      %27 = sbr.rel (0) target = $region9
    $region8: #{tpu_custom_call.1} parent=1 // pred_region
      %s29 = ssub.s32 128, 128
      %30 = vsyncadd [#allocation6], %s29
      %s31 = sshll.u32 [#allocation5], 4
      %s32 = int_to_ptr.vmem [resolvable:$true] %s31
      %37 = dma.hbm_to_vmem [thread:$0]  %s1, 128, %s32, [#allocation6], 64, 64, 4
    $region9: #{tpu_custom_call.1} parent=1 // pred_fallthru
      _
    // Predicated region
    $region10: #{tpu_custom_call.1} parent=1 // pred_check
      _
    $region11: #{tpu_custom_call.1} parent=1 // pred_check_branch
      %39 = sbr.rel (0) target = $region13
    $region12: #{tpu_custom_call.1} parent=1 // pred_region
      _
    $region13: #{tpu_custom_call.1} parent=1 // pred_fallthru
      _
    // Predicated region
    $region14: #{tpu_custom_call.1} parent=1 // pred_check
      _
    $region15: #{tpu_custom_call.1} parent=1 // pred_check_branch
      %41 = sbr.rel (0) target = $region17
    $region16: #{tpu_custom_call.1} parent=1 // pred_region
      %s43 = ssub.s32 1024, 1024
      %44 = vsyncadd [#allocation6], %s43
      %s45 = sshll.u32 [#allocation7], 4
      %s46 = int_to_ptr.vmem [resolvable:$true] %s45
      %51 = dma.hbm_to_vmem [thread:$0]  %s3, 1024, %s46, [#allocation6], 64, 64, 4
    $region17: #{tpu_custom_call.1} parent=1 // pred_fallthru
      _
    // Predicated region
    $region18: #{tpu_custom_call.1} parent=1 // pred_check
      _
    $region19: #{tpu_custom_call.1} parent=1 // pred_check_branch
      %53 = sbr.rel (0) target = $region21
    $region20: #{tpu_custom_call.1} parent=1 // pred_region
      _
    $region21: #{tpu_custom_call.1} parent=1 // pred_fallthru
      _
    // Predicated region
    $region22: #{tpu_custom_call.1} parent=1 // pred_check
      _
    $region23: #{tpu_custom_call.1} parent=1 // pred_check_branch
      %55 = sbr.rel (0) target = $region25
    $region24: #{tpu_custom_call.1} parent=1 // pred_region
      %s57 = ssub.s32 1024, 1024
      %58 = vsyncadd [#allocation9], %s57
      %s59 = sshll.u32 [#allocation8], 4
      %s60 = int_to_ptr.vmem [resolvable:$true] %s59
      %65 = dma.hbm_to_vmem [thread:$0]  %s5, 1024, %s60, [#allocation9], 64, 64, 4
    $region25: #{tpu_custom_call.1} parent=1 // pred_fallthru
      _
    // Predicated region
    $region26: #{tpu_custom_call.1} parent=1 // pred_check
      _
    $region27: #{tpu_custom_call.1} parent=1 // pred_check_branch
      %67 = sbr.rel (0) target = $region29
    $region28: #{tpu_custom_call.1} parent=1 // pred_region
      _
    $region29: #{tpu_custom_call.1} parent=1 // pred_fallthru
      _
    // Predicated region
    $region30: #{tpu_custom_call.1} parent=1 // pred_check
      _
    $region31: #{tpu_custom_call.1} parent=1 // pred_check_branch
      %69 = sbr.rel (0) target = $region33
    $region32: #{tpu_custom_call.1} parent=1 // pred_region
      %70 = dma.done [#allocation3], 128
    $region33: #{tpu_custom_call.1} parent=1 // pred_fallthru
      _
    // Predicated region
    $region34: #{tpu_custom_call.1} parent=1 // pred_check
      _
    $region35: #{tpu_custom_call.1} parent=1 // pred_check_branch
      %72 = sbr.rel (0) target = $region37
    $region36: #{tpu_custom_call.1} parent=1 // pred_region
      %73 = dma.done [#allocation6], 128
    $region37: #{tpu_custom_call.1} parent=1 // pred_fallthru
      _
    // Predicated region
    $region38: #{tpu_custom_call.1} parent=1 // pred_check
      _
    $region39: #{tpu_custom_call.1} parent=1 // pred_check_branch
      %75 = sbr.rel (0) target = $region41
    $region40: #{tpu_custom_call.1} parent=1 // pred_region
      %76 = dma.done [#allocation6], 1024
    $region41: #{tpu_custom_call.1} parent=1 // pred_fallthru
      _
    // Predicated region
    $region42: #{tpu_custom_call.1} parent=1 // pred_check
      _
    $region43: #{tpu_custom_call.1} parent=1 // pred_check_branch
      %78 = sbr.rel (0) target = $region45
    $region44: #{tpu_custom_call.1} parent=1 // pred_region
      %79 = dma.done [#allocation9], 1024
    $region45: #{tpu_custom_call.1} parent=1 // pred_fallthru
      _
    %v81 = vld [vmem:[#allocation2] sm:$0xff]
    %v82 = vld [vmem:[#allocation5] sm:$0xf]
    %v83 = vld [vmem:[#allocation5 + $0x4] sm:$0xf]
    %v84 = vld [vmem:[%s2] sm:$0x1]
    %v85 = vpack.c.bf16 %v81, %v81
    %v87 = vlaneseq
    %v88 = vshrl.u32 %v87, 7
    %v89 = vsub.s32 0, %v88
    %v90 = vrot.slane %v84, %v89
    %v94 = vunpack.c.l.b16 %v82
    %v95 = vunpack.c.l.b16 %v83
    %v96 = vpack.c.b16 %v95, %v94
    %vm98 = vcmask 130048
    %v100 = vsel %vm98, %v85, 0
    %102 = vmatprep.subr.bf16.mxu0 0
    %103 = vmatpush1.bf16.msra.mxu0 %v96
    %104 = vmatprep.subr.bf16.mxu0 0
    %105 = vmatpush1.bf16.msra.mxu0 0
    %106 = vmatprep.subr.bf16.mxu0 0
    %107 = vmatpush1.bf16.msra.mxu0 0
    %108 = vmatprep.subr.bf16.mxu0 0
    %109 = vmatpush1.bf16.msra.mxu0 0
    %110 = vmatprep.subr.bf16.mxu0 0
    %111 = vmatpush1.bf16.msra.mxu0 0
    %112 = vmatprep.subr.bf16.mxu0 0
    %113 = vmatpush1.bf16.msra.mxu0 0
    %114 = vmatprep.subr.bf16.mxu0 0
    %115 = vmatpush1.bf16.msra.mxu0 0
    %116 = vmatprep.subr.bf16.mxu0 0
    %117 = vmatpush1.bf16.msra.mxu0 0
    %118 = vmatprep.subr.bf16.mxu0 0
    %119 = vmatpush1.bf16.msra.mxu0 0
    %120 = vmatprep.subr.bf16.mxu0 0
    %121 = vmatpush1.bf16.msra.mxu0 0
    %122 = vmatprep.subr.bf16.mxu0 0
    %123 = vmatpush1.bf16.msra.mxu0 0
    %124 = vmatprep.subr.bf16.mxu0 0
    %125 = vmatpush1.bf16.msra.mxu0 0
    %126 = vmatprep.subr.bf16.mxu0 0
    %127 = vmatpush1.bf16.msra.mxu0 0
    %128 = vmatprep.subr.bf16.mxu0 0
    %129 = vmatpush1.bf16.msra.mxu0 0
    %130 = vmatprep.subr.bf16.mxu0 0
    %131 = vmatpush1.bf16.msra.mxu0 0
    %132 = vmatprep.subr.bf16.mxu0 0
    %133 = vmatpush1.bf16.msra.mxu0 0
    %134 = vmatprep.mubr.bf16.mxu0 0
    %135 = vmatmul.mubr.bf16.gmra.mrb[0].mxu0 %v100
    %v136 = vpop.f32.mrb[0].mxu0
    %v137 = vadd.f32 %v90, %v136
    %v138 = vpop.f32.mrb[0].mxu0
    %v139 = vpop.f32.mrb[0].mxu0
    %v140 = vpop.f32.mrb[0].mxu0
    %141 = vdwg.mxu0
    %v142 = vmax.f32 %v137, 0.0
    %v143 = vld [vmem:[#allocation7] sm:$0xf]
    %v144 = vld [vmem:[#allocation7 + $0x4] sm:$0xf]
    %v145 = vld [vmem:[#allocation7 + $0x8] sm:$0xf]
    %v146 = vld [vmem:[#allocation7 + $0xc] sm:$0xf]
    %v147 = vld [vmem:[#allocation7 + $0x10] sm:$0xf]
    %v148 = vld [vmem:[#allocation7 + $0x14] sm:$0xf]
    %v149 = vld [vmem:[#allocation7 + $0x18] sm:$0xf]
    %v150 = vld [vmem:[#allocation7 + $0x1c] sm:$0xf]
    %v151 = vld [vmem:[#allocation7 + $0x20] sm:$0xf]
    %v152 = vld [vmem:[#allocation7 + $0x24] sm:$0xf]
    %v153 = vld [vmem:[#allocation7 + $0x28] sm:$0xf]
    %v154 = vld [vmem:[#allocation7 + $0x2c] sm:$0xf]
    %v155 = vld [vmem:[#allocation7 + $0x30] sm:$0xf]
    %v156 = vld [vmem:[#allocation7 + $0x34] sm:$0xf]
    %v157 = vld [vmem:[#allocation7 + $0x38] sm:$0xf]
    %v158 = vld [vmem:[#allocation7 + $0x3c] sm:$0xf]
    %v159 = vld [vmem:[%s4] sm:$0x1]
    %v160 = vpack.c.bf16 %v142, %v142
    %v162 = vlaneseq
    %v163 = vshrl.u32 %v162, 7
    %v164 = vsub.s32 0, %v163
    %v165 = vrot.slane %v159, %v164
    %v183 = vunpack.c.l.b16 %v143
    %v184 = vunpack.c.l.b16 %v144
    %v185 = vunpack.c.l.b16 %v145
    %v186 = vunpack.c.l.b16 %v146
    %v187 = vunpack.c.l.b16 %v147
    %v188 = vunpack.c.l.b16 %v148
    %v189 = vunpack.c.l.b16 %v149
    %v190 = vunpack.c.l.b16 %v150
    %v191 = vunpack.c.l.b16 %v151
    %v192 = vunpack.c.l.b16 %v152
    %v193 = vunpack.c.l.b16 %v153
    %v194 = vunpack.c.l.b16 %v154
    %v195 = vunpack.c.l.b16 %v155
    %v196 = vunpack.c.l.b16 %v156
    %v197 = vunpack.c.l.b16 %v157
    %v198 = vunpack.c.l.b16 %v158
    %v199 = vpack.c.b16 %v184, %v183
    %v200 = vpack.c.b16 %v186, %v185
    %v201 = vpack.c.b16 %v188, %v187
    %v202 = vpack.c.b16 %v190, %v189
    %v203 = vpack.c.b16 %v192, %v191
    %v204 = vpack.c.b16 %v194, %v193
    %v205 = vpack.c.b16 %v196, %v195
    %v206 = vpack.c.b16 %v198, %v197
    %215 = vmatprep.subr.bf16.mxu0 0
    %216 = vmatpush1.bf16.msra.mxu0 %v199
    %217 = vmatprep.subr.bf16.mxu0 0
    %218 = vmatpush1.bf16.msra.mxu0 %v200
    %219 = vmatprep.subr.bf16.mxu0 0
    %220 = vmatpush1.bf16.msra.mxu0 %v201
    %221 = vmatprep.subr.bf16.mxu0 0
    %222 = vmatpush1.bf16.msra.mxu0 %v202
    %223 = vmatprep.subr.bf16.mxu0 0
    %224 = vmatpush1.bf16.msra.mxu0 %v203
    %225 = vmatprep.subr.bf16.mxu0 0
    %226 = vmatpush1.bf16.msra.mxu0 %v204
    %227 = vmatprep.subr.bf16.mxu0 0
    %228 = vmatpush1.bf16.msra.mxu0 %v205
    %229 = vmatprep.subr.bf16.mxu0 0
    %230 = vmatpush1.bf16.msra.mxu0 %v206
    %231 = vmatprep.subr.bf16.mxu0 0
    %232 = vmatpush1.bf16.msra.mxu0 0
    %233 = vmatprep.subr.bf16.mxu0 0
    %234 = vmatpush1.bf16.msra.mxu0 0
    %235 = vmatprep.subr.bf16.mxu0 0
    %236 = vmatpush1.bf16.msra.mxu0 0
    %237 = vmatprep.subr.bf16.mxu0 0
    %238 = vmatpush1.bf16.msra.mxu0 0
    %239 = vmatprep.subr.bf16.mxu0 0
    %240 = vmatpush1.bf16.msra.mxu0 0
    %241 = vmatprep.subr.bf16.mxu0 0
    %242 = vmatpush1.bf16.msra.mxu0 0
    %243 = vmatprep.subr.bf16.mxu0 0
    %244 = vmatpush1.bf16.msra.mxu0 0
    %245 = vmatprep.subr.bf16.mxu0 0
    %246 = vmatpush1.bf16.msra.mxu0 0
    %247 = vmatprep.mubr.bf16.mxu0 0
    %248 = vmatmul.mubr.bf16.gmra.mrb[0].mxu0 %v160
    %v249 = vpop.f32.mrb[0].mxu0
    %v250 = vadd.f32 %v165, %v249
    %v251 = vpop.f32.mrb[0].mxu0
    %v252 = vpop.f32.mrb[0].mxu0
    %v253 = vpop.f32.mrb[0].mxu0
    %254 = vdwg.mxu0
    %v255 = vmax.f32 %v250, 0.0
    %v256 = vld [vmem:[#allocation8] sm:$0xf]
    %v257 = vld [vmem:[#allocation8 + $0x4] sm:$0xf]
    %v258 = vld [vmem:[#allocation8 + $0x8] sm:$0xf]
    %v259 = vld [vmem:[#allocation8 + $0xc] sm:$0xf]
    %v260 = vld [vmem:[#allocation8 + $0x10] sm:$0xf]
    %v261 = vld [vmem:[#allocation8 + $0x14] sm:$0xf]
    %v262 = vld [vmem:[#allocation8 + $0x18] sm:$0xf]
    %v263 = vld [vmem:[#allocation8 + $0x1c] sm:$0xf]
    %v264 = vld [vmem:[#allocation8 + $0x20] sm:$0xf]
    %v265 = vld [vmem:[#allocation8 + $0x24] sm:$0xf]
    %v266 = vld [vmem:[#allocation8 + $0x28] sm:$0xf]
    %v267 = vld [vmem:[#allocation8 + $0x2c] sm:$0xf]
    %v268 = vld [vmem:[#allocation8 + $0x30] sm:$0xf]
    %v269 = vld [vmem:[#allocation8 + $0x34] sm:$0xf]
    %v270 = vld [vmem:[#allocation8 + $0x38] sm:$0xf]
    %v271 = vld [vmem:[#allocation8 + $0x3c] sm:$0xf]
    %v272 = vld [vmem:[%s6] sm:$0x1]
    %v273 = vpack.c.bf16 %v255, %v255
    %v275 = vlaneseq
    %v276 = vshrl.u32 %v275, 7
    %v277 = vsub.s32 0, %v276
    %v278 = vrot.slane %v272, %v277
    %v296 = vunpack.c.l.b16 %v256
    %v297 = vunpack.c.l.b16 %v257
    %v298 = vunpack.c.l.b16 %v258
    %v299 = vunpack.c.l.b16 %v259
    %v300 = vunpack.c.l.b16 %v260
    %v301 = vunpack.c.l.b16 %v261
    %v302 = vunpack.c.l.b16 %v262
    %v303 = vunpack.c.l.b16 %v263
    %v304 = vunpack.c.l.b16 %v264
    %v305 = vunpack.c.l.b16 %v265
    %v306 = vunpack.c.l.b16 %v266
    %v307 = vunpack.c.l.b16 %v267
    %v308 = vunpack.c.l.b16 %v268
    %v309 = vunpack.c.l.b16 %v269
    %v310 = vunpack.c.l.b16 %v270
    %v311 = vunpack.c.l.b16 %v271
    %v312 = vpack.c.b16 %v297, %v296
    %v313 = vpack.c.b16 %v299, %v298
    %v314 = vpack.c.b16 %v301, %v300
    %v315 = vpack.c.b16 %v303, %v302
    %v316 = vpack.c.b16 %v305, %v304
    %v317 = vpack.c.b16 %v307, %v306
    %v318 = vpack.c.b16 %v309, %v308
    %v319 = vpack.c.b16 %v311, %v310
    %328 = vmatprep.subr.bf16.mxu0 0
    %329 = vmatpush1.bf16.msra.mxu0 %v312
    %330 = vmatprep.subr.bf16.mxu0 0
    %331 = vmatpush1.bf16.msra.mxu0 %v313
    %332 = vmatprep.subr.bf16.mxu0 0
    %333 = vmatpush1.bf16.msra.mxu0 %v314
    %334 = vmatprep.subr.bf16.mxu0 0
    %335 = vmatpush1.bf16.msra.mxu0 %v315
    %336 = vmatprep.subr.bf16.mxu0 0
    %337 = vmatpush1.bf16.msra.mxu0 %v316
    %338 = vmatprep.subr.bf16.mxu0 0
    %339 = vmatpush1.bf16.msra.mxu0 %v317
    %340 = vmatprep.subr.bf16.mxu0 0
    %341 = vmatpush1.bf16.msra.mxu0 %v318
    %342 = vmatprep.subr.bf16.mxu0 0
    %343 = vmatpush1.bf16.msra.mxu0 %v319
    %344 = vmatprep.subr.bf16.mxu0 0
    %345 = vmatpush1.bf16.msra.mxu0 0
    %346 = vmatprep.subr.bf16.mxu0 0
    %347 = vmatpush1.bf16.msra.mxu0 0
    %348 = vmatprep.subr.bf16.mxu0 0
    %349 = vmatpush1.bf16.msra.mxu0 0
    %350 = vmatprep.subr.bf16.mxu0 0
    %351 = vmatpush1.bf16.msra.mxu0 0
    %352 = vmatprep.subr.bf16.mxu0 0
    %353 = vmatpush1.bf16.msra.mxu0 0
    %354 = vmatprep.subr.bf16.mxu0 0
    %355 = vmatpush1.bf16.msra.mxu0 0
    %356 = vmatprep.subr.bf16.mxu0 0
    %357 = vmatpush1.bf16.msra.mxu0 0
    %358 = vmatprep.subr.bf16.mxu0 0
    %359 = vmatpush1.bf16.msra.mxu0 0
    %360 = vmatprep.mubr.bf16.mxu0 0
    %361 = vmatmul.mubr.bf16.gmra.mrb[0].mxu0 %v273
    %v362 = vpop.f32.mrb[0].mxu0
    %v363 = vadd.f32 %v278, %v362
    %v364 = vpop.f32.mrb[0].mxu0
    %v365 = vpop.f32.mrb[0].mxu0
    %v366 = vpop.f32.mrb[0].mxu0
    %367 = vdwg.mxu0
    %368 = vst [vmem:[#allocation10] sm:$0xff] %v363
    // Predicated region
    $region46: #{tpu_custom_call.1} parent=1 // pred_check
      _
    $region47: #{tpu_custom_call.1} parent=1 // pred_check_branch
      %370 = sbr.rel (0) target = $region49
    $region48: #{tpu_custom_call.1} parent=1 // pred_region
      %s372 = ssub.s32 128, 128
      %373 = vsyncadd [#allocation4], %s372
      %s375 = sshll.u32 [#allocation10], 4
      %s376 = int_to_ptr.vmem [resolvable:$true] %s375
      %378 = dma.vmem_to_hbm [thread:$0]  %s376, 128, %s7, [#allocation4]
    $region49: #{tpu_custom_call.1} parent=1 // pred_fallthru
      _
    // Predicated region
    $region50: #{tpu_custom_call.1} parent=1 // pred_check
      _
    $region51: #{tpu_custom_call.1} parent=1 // pred_check_branch
      %380 = sbr.rel (0) target = $region53
    $region52: #{tpu_custom_call.1} parent=1 // pred_region
      %381 = dma.done [#allocation4], 128
    $region53: #{tpu_custom_call.1} parent=1 // pred_fallthru
      _
    %382 = vsyncpa [#allocation3], 1
    %383 = vsyncpa [#allocation6], 1
    %384 = vsyncpa [#allocation9], 1
    %385 = vsyncpa [#allocation4], 1

// kernel: tpu_custom_call.1
$region0: #{tpu_custom_call.1}
  #allocation0 [shape = 'u32[]', space=smem, size = 0x4, offset = 0x4, fixed_abs, tag = 'smem constant byte address 0x4 - core index']
  #allocation1 [shape = 'u32[144,128]{1,0:T(1,128)}', space=vmem, size = 0x12000, scoped, tag = 'internal scratch']
  %s0 = inlined_call_operand.hbm [shape: f32[8,16], index: 0, kind: input, shape index: {}]
  %s1 = inlined_call_operand.hbm [shape: bf16[16,128], index: 1, kind: input, shape index: {}]
  %s2 = inlined_call_operand.vmem [shape: f32[1,128], index: 2, kind: input, shape index: {}]
  %s3 = inlined_call_operand.hbm [shape: bf16[128,128], index: 3, kind: input, shape index: {}]
  %s4 = inlined_call_operand.vmem [shape: f32[1,128], index: 4, kind: input, shape index: {}]
  %s5 = inlined_call_operand.hbm [shape: bf16[128,128], index: 5, kind: input, shape index: {}]
  %s6 = inlined_call_operand.vmem [shape: f32[1,128], index: 6, kind: input, shape index: {}]
  %s7 = inlined_call_operand.hbm [shape: f32[8,128], index: 7, kind: output, shape index: {}]
  %s8 = sld [smem:[#allocation0]]
  $region54: #{tpu_custom_call.1} parent=0
    _
  %s10 = ssub.s32 1, %s8
  %s11 = scalar_select 0, %s10, %s8
  $region1: #{tpu_custom_call.1} parent=0
    #allocation2 [shape = 'u8[4096]{0}', space=vmem, size = 0x1000, scoped, tag = 'input window, operand 0, single buffered']
    #allocation3 [shape = 's32[1]{0}', space=sflag, size = 0x4, scoped, tag = 'scoped memory for tpu_custom_call.1']
    #allocation4 [shape = 's32[1]{0}', space=sflag, size = 0x4, scoped, tag = 'scoped memory for tpu_custom_call.1']
    #allocation5 [shape = 'u8[4096]{0}', space=vmem, size = 0x1000, scoped, tag = 'input window, operand 1, single buffered']
    #allocation6 [shape = 's32[1]{0}', space=sflag, size = 0x4, scoped, tag = 'scoped memory for tpu_custom_call.1']
    #allocation7 [shape = 'u8[32768]{0}', space=vmem, size = 0x8000, scoped, tag = 'input window, operand 3, single buffered']
    #allocation8 [shape = 'u8[32768]{0}', space=vmem, size = 0x8000, scoped, tag = 'input window, operand 5, single buffered']
    #allocation9 [shape = 's32[1]{0}', space=sflag, size = 0x4, scoped, tag = 'scoped memory for tpu_custom_call.1']
    #allocation10 [shape = 'u8[4096]{0}', space=vmem, size = 0x1000, scoped, tag = 'output window, operand 0, single buffered']
    %12 = vsyncpa [#allocation3], 0
    %13 = vsyncpa [#allocation6], 0
    %14 = vsyncpa [#allocation9], 0
    %15 = vsyncpa [#allocation4], 0
    // Predicated region
    $region2: #{tpu_custom_call.1} parent=1 // pred_check
      _
    $region3: #{tpu_custom_call.1} parent=1 // pred_check_branch
      %17 = sbr.rel (0) target = $region5
    $region4: #{tpu_custom_call.1} parent=1 // pred_region
      %s19 = ssub.s32 128, 128
      %20 = vsyncadd [#allocation3], %s19
      %s22 = sshll.u32 [#allocation2], 4
      %s23 = int_to_ptr.vmem [resolvable:$true] %s22
      %25 = dma.hbm_to_vmem [thread:$0]  %s0, 128, %s23, [#allocation3]
    $region5: #{tpu_custom_call.1} parent=1 // pred_fallthru
      _
    // Predicated region
    $region6: #{tpu_custom_call.1} parent=1 // pred_check
      _
    $region7: #{tpu_custom_call.1} parent=1 // pred_check_branch
      %27 = sbr.rel (0) target = $region9
    $region8: #{tpu_custom_call.1} parent=1 // pred_region
      %s29 = ssub.s32 128, 128
      %30 = vsyncadd [#allocation6], %s29
      %s31 = sshll.u32 [#allocation5], 4
      %s32 = int_to_ptr.vmem [resolvable:$true] %s31
      %37 = dma.hbm_to_vmem [thread:$0]  %s1, 128, %s32, [#allocation6], 64, 64, 4
    $region9: #{tpu_custom_call.1} parent=1 // pred_fallthru
      _
    // Predicated region
    $region10: #{tpu_custom_call.1} parent=1 // pred_check
      _
    $region11: #{tpu_custom_call.1} parent=1 // pred_check_branch
      %39 = sbr.rel (0) target = $region13
    $region12: #{tpu_custom_call.1} parent=1 // pred_region
      _
    $region13: #{tpu_custom_call.1} parent=1 // pred_fallthru
      _
    // Predicated region
    $region14: #{tpu_custom_call.1} parent=1 // pred_check
      _
    $region15: #{tpu_custom_call.1} parent=1 // pred_check_branch
      %41 = sbr.rel (0) target = $region17
    $region16: #{tpu_custom_call.1} parent=1 // pred_region
      %s43 = ssub.s32 1024, 1024
      %44 = vsyncadd [#allocation6], %s43
      %s45 = sshll.u32 [#allocation7], 4
      %s46 = int_to_ptr.vmem [resolvable:$true] %s45
      %51 = dma.hbm_to_vmem [thread:$0]  %s3, 1024, %s46, [#allocation6], 64, 64, 4
    $region17: #{tpu_custom_call.1} parent=1 // pred_fallthru
      _
    // Predicated region
    $region18: #{tpu_custom_call.1} parent=1 // pred_check
      _
    $region19: #{tpu_custom_call.1} parent=1 // pred_check_branch
      %53 = sbr.rel (0) target = $region21
    $region20: #{tpu_custom_call.1} parent=1 // pred_region
      _
    $region21: #{tpu_custom_call.1} parent=1 // pred_fallthru
      _
    // Predicated region
    $region22: #{tpu_custom_call.1} parent=1 // pred_check
      _
    $region23: #{tpu_custom_call.1} parent=1 // pred_check_branch
      %55 = sbr.rel (0) target = $region25
    $region24: #{tpu_custom_call.1} parent=1 // pred_region
      %s57 = ssub.s32 1024, 1024
      %58 = vsyncadd [#allocation9], %s57
      %s59 = sshll.u32 [#allocation8], 4
      %s60 = int_to_ptr.vmem [resolvable:$true] %s59
      %65 = dma.hbm_to_vmem [thread:$0]  %s5, 1024, %s60, [#allocation9], 64, 64, 4
    $region25: #{tpu_custom_call.1} parent=1 // pred_fallthru
      _
    // Predicated region
    $region26: #{tpu_custom_call.1} parent=1 // pred_check
      _
    $region27: #{tpu_custom_call.1} parent=1 // pred_check_branch
      %67 = sbr.rel (0) target = $region29
    $region28: #{tpu_custom_call.1} parent=1 // pred_region
      _
    $region29: #{tpu_custom_call.1} parent=1 // pred_fallthru
      _
    // Predicated region
    $region30: #{tpu_custom_call.1} parent=1 // pred_check
      _
    $region31: #{tpu_custom_call.1} parent=1 // pred_check_branch
      %69 = sbr.rel (0) target = $region33
    $region32: #{tpu_custom_call.1} parent=1 // pred_region
      %70 = dma.done [#allocation3], 128
    $region33: #{tpu_custom_call.1} parent=1 // pred_fallthru
      _
    // Predicated region
    $region34: #{tpu_custom_call.1} parent=1 // pred_check
      _
    $region35: #{tpu_custom_call.1} parent=1 // pred_check_branch
      %72 = sbr.rel (0) target = $region37
    $region36: #{tpu_custom_call.1} parent=1 // pred_region
      %73 = dma.done [#allocation6], 128
    $region37: #{tpu_custom_call.1} parent=1 // pred_fallthru
      _
    // Predicated region
    $region38: #{tpu_custom_call.1} parent=1 // pred_check
      _
    $region39: #{tpu_custom_call.1} parent=1 // pred_check_branch
      %75 = sbr.rel (0) target = $region41
    $region40: #{tpu_custom_call.1} parent=1 // pred_region
      %76 = dma.done [#allocation6], 1024
    $region41: #{tpu_custom_call.1} parent=1 // pred_fallthru
      _
    // Predicated region
    $region42: #{tpu_custom_call.1} parent=1 // pred_check
      _
    $region43: #{tpu_custom_call.1} parent=1 // pred_check_branch
      %78 = sbr.rel (0) target = $region45
    $region44: #{tpu_custom_call.1} parent=1 // pred_region
      %79 = dma.done [#allocation9], 1024
    $region45: #{tpu_custom_call.1} parent=1 // pred_fallthru
      _
    %v81 = vld [vmem:[#allocation2] sm:$0xff]
    %v82 = vld [vmem:[#allocation5] sm:$0xf]
    %v83 = vld [vmem:[#allocation5 + $0x4] sm:$0xf]
    %v84 = vld [vmem:[%s2] sm:$0x1]
    %v85 = vpack.c.bf16 %v81, %v81
    %v87 = vlaneseq
    %v88 = vshrl.u32 %v87, 7
    %v89 = vsub.s32 0, %v88
    %v90 = vrot.slane %v84, %v89
    %v94 = vunpack.c.l.b16 %v82
    %v95 = vunpack.c.l.b16 %v83
    %v96 = vpack.c.b16 %v95, %v94
    %vm98 = vcmask 130048
    %v100 = vsel %vm98, %v85, 0
    %102 = vmatprep.subr.bf16.mxu0 0
    %103 = vmatpush1.bf16.msra.mxu0 %v96
    %104 = vmatprep.subr.bf16.mxu0 0
    %105 = vmatpush1.bf16.msra.mxu0 0
    %106 = vmatprep.subr.bf16.mxu0 0
    %107 = vmatpush1.bf16.msra.mxu0 0
    %108 = vmatprep.subr.bf16.mxu0 0
    %109 = vmatpush1.bf16.msra.mxu0 0
    %110 = vmatprep.subr.bf16.mxu0 0
    %111 = vmatpush1.bf16.msra.mxu0 0
    %112 = vmatprep.subr.bf16.mxu0 0
    %113 = vmatpush1.bf16.msra.mxu0 0
    %114 = vmatprep.subr.bf16.mxu0 0
    %115 = vmatpush1.bf16.msra.mxu0 0
    %116 = vmatprep.subr.bf16.mxu0 0
    %117 = vmatpush1.bf16.msra.mxu0 0
    %118 = vmatprep.subr.bf16.mxu0 0
    %119 = vmatpush1.bf16.msra.mxu0 0
    %120 = vmatprep.subr.bf16.mxu0 0
    %121 = vmatpush1.bf16.msra.mxu0 0
    %122 = vmatprep.subr.bf16.mxu0 0
    %123 = vmatpush1.bf16.msra.mxu0 0
    %124 = vmatprep.subr.bf16.mxu0 0
    %125 = vmatpush1.bf16.msra.mxu0 0
    %126 = vmatprep.subr.bf16.mxu0 0
    %127 = vmatpush1.bf16.msra.mxu0 0
    %128 = vmatprep.subr.bf16.mxu0 0
    %129 = vmatpush1.bf16.msra.mxu0 0
    %130 = vmatprep.subr.bf16.mxu0 0
    %131 = vmatpush1.bf16.msra.mxu0 0
    %132 = vmatprep.subr.bf16.mxu0 0
    %133 = vmatpush1.bf16.msra.mxu0 0
    %134 = vmatprep.mubr.bf16.mxu0 0
    %135 = vmatmul.mubr.bf16.gmra.mrb[0].mxu0 %v100
    %v136 = vpop.f32.mrb[0].mxu0
    %v137 = vadd.f32 %v90, %v136
    %v138 = vpop.f32.mrb[0].mxu0
    %v139 = vpop.f32.mrb[0].mxu0
    %v140 = vpop.f32.mrb[0].mxu0
    %141 = vdwg.mxu0
    %v142 = vmax.f32 %v137, 0.0
    %v143 = vld [vmem:[#allocation7] sm:$0xf]
    %v144 = vld [vmem:[#allocation7 + $0x4] sm:$0xf]
    %v145 = vld [vmem:[#allocation7 + $0x8] sm:$0xf]
    %v146 = vld [vmem:[#allocation7 + $0xc] sm:$0xf]
    %v147 = vld [vmem:[#allocation7 + $0x10] sm:$0xf]
    %v148 = vld [vmem:[#allocation7 + $0x14] sm:$0xf]
    %v149 = vld [vmem:[#allocation7 + $0x18] sm:$0xf]
    %v150 = vld [vmem:[#allocation7 + $0x1c] sm:$0xf]
    %v151 = vld [vmem:[#allocation7 + $0x20] sm:$0xf]
    %v152 = vld [vmem:[#allocation7 + $0x24] sm:$0xf]
    %v153 = vld [vmem:[#allocation7 + $0x28] sm:$0xf]
    %v154 = vld [vmem:[#allocation7 + $0x2c] sm:$0xf]
    %v155 = vld [vmem:[#allocation7 + $0x30] sm:$0xf]
    %v156 = vld [vmem:[#allocation7 + $0x34] sm:$0xf]
    %v157 = vld [vmem:[#allocation7 + $0x38] sm:$0xf]
    %v158 = vld [vmem:[#allocation7 + $0x3c] sm:$0xf]
    %v159 = vld [vmem:[%s4] sm:$0x1]
    %v160 = vpack.c.bf16 %v142, %v142
    %v162 = vlaneseq
    %v163 = vshrl.u32 %v162, 7
    %v164 = vsub.s32 0, %v163
    %v165 = vrot.slane %v159, %v164
    %v183 = vunpack.c.l.b16 %v143
    %v184 = vunpack.c.l.b16 %v144
    %v185 = vunpack.c.l.b16 %v145
    %v186 = vunpack.c.l.b16 %v146
    %v187 = vunpack.c.l.b16 %v147
    %v188 = vunpack.c.l.b16 %v148
    %v189 = vunpack.c.l.b16 %v149
    %v190 = vunpack.c.l.b16 %v150
    %v191 = vunpack.c.l.b16 %v151
    %v192 = vunpack.c.l.b16 %v152
    %v193 = vunpack.c.l.b16 %v153
    %v194 = vunpack.c.l.b16 %v154
    %v195 = vunpack.c.l.b16 %v155
    %v196 = vunpack.c.l.b16 %v156
    %v197 = vunpack.c.l.b16 %v157
    %v198 = vunpack.c.l.b16 %v158
    %v199 = vpack.c.b16 %v184, %v183
    %v200 = vpack.c.b16 %v186, %v185
    %v201 = vpack.c.b16 %v188, %v187
    %v202 = vpack.c.b16 %v190, %v189
    %v203 = vpack.c.b16 %v192, %v191
    %v204 = vpack.c.b16 %v194, %v193
    %v205 = vpack.c.b16 %v196, %v195
    %v206 = vpack.c.b16 %v198, %v197
    %215 = vmatprep.subr.bf16.mxu0 0
    %216 = vmatpush1.bf16.msra.mxu0 %v199
    %217 = vmatprep.subr.bf16.mxu0 0
    %218 = vmatpush1.bf16.msra.mxu0 %v200
    %219 = vmatprep.subr.bf16.mxu0 0
    %220 = vmatpush1.bf16.msra.mxu0 %v201
    %221 = vmatprep.subr.bf16.mxu0 0
    %222 = vmatpush1.bf16.msra.mxu0 %v202
    %223 = vmatprep.subr.bf16.mxu0 0
    %224 = vmatpush1.bf16.msra.mxu0 %v203
    %225 = vmatprep.subr.bf16.mxu0 0
    %226 = vmatpush1.bf16.msra.mxu0 %v204
    %227 = vmatprep.subr.bf16.mxu0 0
    %228 = vmatpush1.bf16.msra.mxu0 %v205
    %229 = vmatprep.subr.bf16.mxu0 0
    %230 = vmatpush1.bf16.msra.mxu0 %v206
    %231 = vmatprep.subr.bf16.mxu0 0
    %232 = vmatpush1.bf16.msra.mxu0 0
    %233 = vmatprep.subr.bf16.mxu0 0
    %234 = vmatpush1.bf16.msra.mxu0 0
    %235 = vmatprep.subr.bf16.mxu0 0
    %236 = vmatpush1.bf16.msra.mxu0 0
    %237 = vmatprep.subr.bf16.mxu0 0
    %238 = vmatpush1.bf16.msra.mxu0 0
    %239 = vmatprep.subr.bf16.mxu0 0
    %240 = vmatpush1.bf16.msra.mxu0 0
    %241 = vmatprep.subr.bf16.mxu0 0
    %242 = vmatpush1.bf16.msra.mxu0 0
    %243 = vmatprep.subr.bf16.mxu0 0
    %244 = vmatpush1.bf16.msra.mxu0 0
    %245 = vmatprep.subr.bf16.mxu0 0
    %246 = vmatpush1.bf16.msra.mxu0 0
    %247 = vmatprep.mubr.bf16.mxu0 0
    %248 = vmatmul.mubr.bf16.gmra.mrb[0].mxu0 %v160
    %v249 = vpop.f32.mrb[0].mxu0
    %v250 = vadd.f32 %v165, %v249
    %v251 = vpop.f32.mrb[0].mxu0
    %v252 = vpop.f32.mrb[0].mxu0
    %v253 = vpop.f32.mrb[0].mxu0
    %254 = vdwg.mxu0
    %v255 = vmax.f32 %v250, 0.0
    %v256 = vld [vmem:[#allocation8] sm:$0xf]
    %v257 = vld [vmem:[#allocation8 + $0x4] sm:$0xf]
    %v258 = vld [vmem:[#allocation8 + $0x8] sm:$0xf]
    %v259 = vld [vmem:[#allocation8 + $0xc] sm:$0xf]
    %v260 = vld [vmem:[#allocation8 + $0x10] sm:$0xf]
    %v261 = vld [vmem:[#allocation8 + $0x14] sm:$0xf]
    %v262 = vld [vmem:[#allocation8 + $0x18] sm:$0xf]
    %v263 = vld [vmem:[#allocation8 + $0x1c] sm:$0xf]
    %v264 = vld [vmem:[#allocation8 + $0x20] sm:$0xf]
    %v265 = vld [vmem:[#allocation8 + $0x24] sm:$0xf]
    %v266 = vld [vmem:[#allocation8 + $0x28] sm:$0xf]
    %v267 = vld [vmem:[#allocation8 + $0x2c] sm:$0xf]
    %v268 = vld [vmem:[#allocation8 + $0x30] sm:$0xf]
    %v269 = vld [vmem:[#allocation8 + $0x34] sm:$0xf]
    %v270 = vld [vmem:[#allocation8 + $0x38] sm:$0xf]
    %v271 = vld [vmem:[#allocation8 + $0x3c] sm:$0xf]
    %v272 = vld [vmem:[%s6] sm:$0x1]
    %v273 = vpack.c.bf16 %v255, %v255
    %v275 = vlaneseq
    %v276 = vshrl.u32 %v275, 7
    %v277 = vsub.s32 0, %v276
    %v278 = vrot.slane %v272, %v277
    %v296 = vunpack.c.l.b16 %v256
    %v297 = vunpack.c.l.b16 %v257
    %v298 = vunpack.c.l.b16 %v258
    %v299 = vunpack.c.l.b16 %v259
    %v300 = vunpack.c.l.b16 %v260
    %v301 = vunpack.c.l.b16 %v261
    %v302 = vunpack.c.l.b16 %v262
    %v303 = vunpack.c.l.b16 %v263
    %v304 = vunpack.c.l.b16 %v264
    %v305 = vunpack.c.l.b16 %v265
    %v306 = vunpack.c.l.b16 %v266
    %v307 = vunpack.c.l.b16 %v267
    %v308 = vunpack.c.l.b16 %v268
    %v309 = vunpack.c.l.b16 %v269
    %v310 = vunpack.c.l.b16 %v270
    %v311 = vunpack.c.l.b16 %v271
    %v312 = vpack.c.b16 %v297, %v296
    %v313 = vpack.c.b16 %v299, %v298
    %v314 = vpack.c.b16 %v301, %v300
    %v315 = vpack.c.b16 %v303, %v302
    %v316 = vpack.c.b16 %v305, %v304
    %v317 = vpack.c.b16 %v307, %v306
    %v318 = vpack.c.b16 %v309, %v308
    %v319 = vpack.c.b16 %v311, %v310
    %328 = vmatprep.subr.bf16.mxu0 0
    %329 = vmatpush1.bf16.msra.mxu0 %v312
    %330 = vmatprep.subr.bf16.mxu0 0
    %331 = vmatpush1.bf16.msra.mxu0 %v313
    %332 = vmatprep.subr.bf16.mxu0 0
    %333 = vmatpush1.bf16.msra.mxu0 %v314
    %334 = vmatprep.subr.bf16.mxu0 0
    %335 = vmatpush1.bf16.msra.mxu0 %v315
    %336 = vmatprep.subr.bf16.mxu0 0
    %337 = vmatpush1.bf16.msra.mxu0 %v316
    %338 = vmatprep.subr.bf16.mxu0 0
    %339 = vmatpush1.bf16.msra.mxu0 %v317
    %340 = vmatprep.subr.bf16.mxu0 0
    %341 = vmatpush1.bf16.msra.mxu0 %v318
    %342 = vmatprep.subr.bf16.mxu0 0
    %343 = vmatpush1.bf16.msra.mxu0 %v319
    %344 = vmatprep.subr.bf16.mxu0 0
    %345 = vmatpush1.bf16.msra.mxu0 0
    %346 = vmatprep.subr.bf16.mxu0 0
    %347 = vmatpush1.bf16.msra.mxu0 0
    %348 = vmatprep.subr.bf16.mxu0 0
    %349 = vmatpush1.bf16.msra.mxu0 0
    %350 = vmatprep.subr.bf16.mxu0 0
    %351 = vmatpush1.bf16.msra.mxu0 0
    %352 = vmatprep.subr.bf16.mxu0 0
    %353 = vmatpush1.bf16.msra.mxu0 0
    %354 = vmatprep.subr.bf16.mxu0 0
    %355 = vmatpush1.bf16.msra.mxu0 0
    %356 = vmatprep.subr.bf16.mxu0 0
    %357 = vmatpush1.bf16.msra.mxu0 0
    %358 = vmatprep.subr.bf16.mxu0 0
    %359 = vmatpush1.bf16.msra.mxu0 0
    %360 = vmatprep.mubr.bf16.mxu0 0
    %361 = vmatmul.mubr.bf16.gmra.mrb[0].mxu0 %v273
    %v362 = vpop.f32.mrb[0].mxu0
    %v363 = vadd.f32 %v278, %v362
    %v364 = vpop.f32.mrb[0].mxu0
    %v365 = vpop.f32.mrb[0].mxu0
    %v366 = vpop.f32.mrb[0].mxu0
    %367 = vdwg.mxu0
    %368 = vst [vmem:[#allocation10] sm:$0xff] %v363
    // Predicated region
    $region46: #{tpu_custom_call.1} parent=1 // pred_check
      _
    $region47: #{tpu_custom_call.1} parent=1 // pred_check_branch
      %370 = sbr.rel (0) target = $region49
    $region48: #{tpu_custom_call.1} parent=1 // pred_region
      %s372 = ssub.s32 128, 128
      %373 = vsyncadd [#allocation4], %s372
      %s375 = sshll.u32 [#allocation10], 4
      %s376 = int_to_ptr.vmem [resolvable:$true] %s375
      %378 = dma.vmem_to_hbm [thread:$0]  %s376, 128, %s7, [#allocation4]
    $region49: #{tpu_custom_call.1} parent=1 // pred_fallthru
      _
    // Predicated region
    $region50: #{tpu_custom_call.1} parent=1 // pred_check
      _
    $region51: #{tpu_custom_call.1} parent=1 // pred_check_branch
      %380 = sbr.rel (0) target = $region53
    $region52: #{tpu_custom_call.1} parent=1 // pred_region
      %381 = dma.done [#allocation4], 128
    $region53: #{tpu_custom_call.1} parent=1 // pred_fallthru
      _
    %382 = vsyncpa [#allocation3], 1
    %383 = vsyncpa [#allocation6], 1
    %384 = vsyncpa [#allocation9], 1
    %385 = vsyncpa [#allocation4], 1

</llo_original>
